<compile_context>
chip_gen: v5e
topology: v5e:2x2
jax: 0.10.0
libtpu: 0.0.40
codegen_flags: <defaults>
</compile_context>

<pallas_src>
import jax
import jax.numpy as jnp
from jax.experimental import pallas as pl
from jax.experimental.pallas import tpu as pltpu

DTYPE = jnp.float32
BIAS_WIDTH = 4.0
EXPONENT = 3.0

_LANES = 128
_SUBLANES = 8
_SLAB = _LANES * _SUBLANES  # 1024 elements = one full (8,128) f32 vreg

# Derived constants (compile-time Python floats).
_MANT_SCALE_EXP = EXPONENT + BIAS_WIDTH - 1.0          # 6.0  -> 2^6 = 64
_MANT_MIN = -(2.0 ** (BIAS_WIDTH - 1.0))               # -8
_MANT_MAX = 2.0 ** (BIAS_WIDTH - 1.0) - 1.0            # 7
_INV_SCALE = 2.0 ** (-EXPONENT - BIAS_WIDTH + 1.0)     # 1/64
_Q_MIN = 2.0 ** (-EXPONENT - BIAS_WIDTH)               # 1/128
_Q_MAX = 15.0 * 2.0 ** (-EXPONENT - BIAS_WIDTH)        # 15/128


def _make_kernel(clip_only: bool, wes_is_scalar: bool):
    """Build a kernel body for (quantize|clip) x (per-channel|scalar wes)."""

    def kernel(bias_ref, wes_ref, out_ref):
        bias = bias_ref[...]                      # (rows, 128) f32, lane-dense
        if wes_is_scalar:
            wes = wes_ref[0, 0]                   # scalar read from SMEM
        else:
            wes = wes_ref[...]                    # (rows, 128) f32

        if clip_only:
            x = bias * jnp.exp2(-wes)             # EUP exp2 + one VALU mul
            clipped = jnp.clip(jnp.abs(x), _Q_MIN, _Q_MAX)
            signed = jnp.where(x < 0.0, -clipped, clipped)
            # sign(0) == 0 in the torch reference -> zero stays zero.
            out_ref[...] = jnp.where(x == 0.0, 0.0, signed)
        else:
            # Fold the 64x mantissa scale into the exponent: 2^(6 - wes).
            mant = jnp.round(bias * jnp.exp2(_MANT_SCALE_EXP - wes))
            mant = jnp.clip(mant, _MANT_MIN, _MANT_MAX)
            out_ref[...] = mant * _INV_SCALE

    return kernel


def bias_quantize_forward(bias, weight_exp_shift, *, clip_only: bool):
    """Matches bias_quantize(clip_only).forward(bias, weight_exp_shift)."""
    bias = jnp.asarray(bias, DTYPE)
    wes = jnp.asarray(weight_exp_shift, DTYPE)

    orig_shape = bias.shape
    c = bias.size

    # Pad to a full (rows, 128) slab with rows a multiple of 8 so both loads
    # and the output store are unmasked, full-vreg operations.
    c_pad = max(_SLAB, ((c + _SLAB - 1) // _SLAB) * _SLAB)
    rows = c_pad // _LANES

    bias_flat = bias.reshape(-1)
    bias_slab = jnp.pad(bias_flat, (0, c_pad - c)).reshape(rows, _LANES)

    wes_is_scalar = wes.size == 1
    if wes_is_scalar:
        # Scalar exponent shift: ship as (1,1) in SMEM, read once in-kernel.
        wes_arg = wes.reshape(1, 1)
        wes_spec = pl.BlockSpec(memory_space=pltpu.MemorySpace.SMEM)
    else:
        if wes.shape != orig_shape:
            # Rare: non-scalar shift with broadcasting shape.
            wes = jnp.broadcast_to(wes, orig_shape)
        wes_flat = wes.reshape(-1)
        wes_arg = jnp.pad(wes_flat, (0, c_pad - c)).reshape(rows, _LANES)
        wes_spec = pl.BlockSpec((rows, _LANES), lambda: (0, 0))

    kernel = _make_kernel(clip_only, wes_is_scalar)

    out = pl.pallas_call(
        kernel,
        out_shape=jax.ShapeDtypeStruct((rows, _LANES), DTYPE),
        in_specs=[
            pl.BlockSpec((rows, _LANES), lambda: (0, 0)),
            wes_spec,
        ],
        out_specs=pl.BlockSpec((rows, _LANES), lambda: (0, 0)),
    )(bias_slab, wes_arg)

    return out.reshape(-1)[:c].reshape(orig_shape)


def _reference(bias, wes, clip_only):
    """Pure-jnp reference mirroring the PyTorch module exactly."""
    bias = jnp.asarray(bias, DTYPE)
    wes = jnp.broadcast_to(jnp.asarray(wes, DTYPE), bias.shape)
    x = bias * 2.0 ** (-wes)
    if clip_only:
        sign = jnp.sign(x)
        return sign * jnp.clip(jnp.abs(x), _Q_MIN, _Q_MAX)
    mant = jnp.round(2.0 ** _MANT_SCALE_EXP * x)
    mant = jnp.clip(mant, _MANT_MIN, _MANT_MAX)
    return mant * _INV_SCALE


if __name__ == "__main__":
    key = jax.random.PRNGKey(0)
    k1, k2, k3, k4 = jax.random.split(key, 4)

    # Small per-output-channel conv bias.
    C = 32
    bias = jax.random.normal(k1, (C,), dtype=DTYPE) * 0.3
    # Integer-ish per-channel exponent shifts, as produced by the weight quantizer.
    wes_vec = jnp.round(
        jax.random.uniform(k2, (C,), dtype=DTYPE, minval=-2.0, maxval=3.0)
    )
    # Scalar exponent shift (exercises the SMEM path).
    wes_scalar = jnp.asarray(1.0, DTYPE)

    # A larger, non-multiple-of-1024 channel count (exercises padding/slicing).
    C2 = 1500
    bias2 = jax.random.normal(k3, (C2,), dtype=DTYPE) * 0.3
    wes2 = jnp.round(
        jax.random.uniform(k4, (C2,), dtype=DTYPE, minval=-2.0, maxval=3.0)
    )

    outs = (
        bias_quantize_forward(bias, wes_vec, clip_only=False),
        bias_quantize_forward(bias, wes_vec, clip_only=True),
        bias_quantize_forward(bias, wes_scalar, clip_only=False),
        bias_quantize_forward(bias, wes_scalar, clip_only=True),
        bias_quantize_forward(bias2, wes2, clip_only=False),
        bias_quantize_forward(bias2, wes2, clip_only=True),
    )
    jax.block_until_ready(outs)

    refs = (
        _reference(bias, wes_vec, False),
        _reference(bias, wes_vec, True),
        _reference(bias, wes_scalar, False),
        _reference(bias, wes_scalar, True),
        _reference(bias2, wes2, False),
        _reference(bias2, wes2, True),
    )

    for i, (o, r) in enumerate(zip(outs, refs)):
        assert o.shape == r.shape, f"case {i}: shape mismatch {o.shape} vs {r.shape}"
        assert jnp.allclose(o, r, atol=1e-6), f"case {i}: value mismatch"

    print("KERNEL_OK")
</pallas_src>

<mosaic_0001>
module attributes {stable_mosaic.version = 11 : i64} {
  func.func @kernel(%arg0: memref<8x128xf32, #tpu.memory_space<vmem>>, %arg1: memref<8x128xf32, #tpu.memory_space<vmem>>, %arg2: memref<8x128xf32, #tpu.memory_space<vmem>>) attributes {dimension_semantics = [], scalar_prefetch = 0 : i64, scratch_operands = 0 : i64, tpu.core_type = #tpu.core_type<tc>} {
    %c0 = arith.constant 0 : index
    %c0_0 = arith.constant 0 : index
    %0 = vector.load %arg0[%c0, %c0_0] : memref<8x128xf32, #tpu.memory_space<vmem>>, vector<8x128xf32>
    %c0_1 = arith.constant 0 : index
    %c0_2 = arith.constant 0 : index
    %1 = vector.load %arg1[%c0_1, %c0_2] : memref<8x128xf32, #tpu.memory_space<vmem>>, vector<8x128xf32>
    %cst = arith.constant 6.000000e+00 : f32
    %2 = vector.broadcast %cst : f32 to vector<8x128xf32>
    %3 = arith.subf %2, %1 : vector<8x128xf32>
    %4 = math.exp2 %3 : vector<8x128xf32>
    %5 = arith.mulf %0, %4 : vector<8x128xf32>
    %6 = math.roundeven %5 : vector<8x128xf32>
    %cst_3 = arith.constant -8.000000e+00 : f32
    %cst_4 = arith.constant 7.000000e+00 : f32
    %7 = vector.broadcast %cst_3 : f32 to vector<8x128xf32>
    %8 = arith.maximumf %7, %6 : vector<8x128xf32>
    %9 = vector.broadcast %cst_4 : f32 to vector<8x128xf32>
    %10 = arith.minimumf %9, %8 : vector<8x128xf32>
    %cst_5 = arith.constant 1.562500e-02 : f32
    %11 = vector.broadcast %cst_5 : f32 to vector<8x128xf32>
    %12 = arith.mulf %10, %11 : vector<8x128xf32>
    %c0_6 = arith.constant 0 : index
    %c0_7 = arith.constant 0 : index
    %13 = vector.load %arg2[%c0_6, %c0_7] : memref<8x128xf32, #tpu.memory_space<vmem>>, vector<8x128xf32>
    tpu.vector_store %arg2[%c0_6, %c0_7], %12 {strides = array<i32>} : memref<8x128xf32, #tpu.memory_space<vmem>>, vector<8x128xf32>,
    return
  }
}

</mosaic_0001>

<llo_original>
// kernel: tpu_custom_call.1
$region0: #{tpu_custom_call.1}
  #allocation0 [shape = 'u32[]', space=smem, size = 0x4, offset = 0x4, fixed_abs, tag = 'smem constant byte address 0x4 - core index']
  #allocation1 [shape = 'u32[72,128]{1,0:T(1,128)}', space=vmem, size = 0x9000, scoped, tag = 'internal scratch']
  %s0 = inlined_call_operand.hbm [shape: f32[8,128], index: 0, kind: input, shape index: {}]
  %s1 = inlined_call_operand.hbm [shape: f32[8,128], index: 1, kind: input, shape index: {}]
  %s2 = inlined_call_operand.hbm [shape: f32[8,128], index: 2, kind: output, shape index: {}]
  %s3 = sld [smem:[#allocation0]]
  $region26: #{tpu_custom_call.1} parent=0
    _
  %s5 = ssub.s32 1, %s3
  %s6 = scalar_select 0, %s5, %s3
  $region1: #{tpu_custom_call.1} parent=0
    #allocation2 [shape = 'u8[4096]{0}', space=vmem, size = 0x1000, scoped, tag = 'input window, operand 0, single buffered']
    #allocation3 [shape = 's32[1]{0}', space=sflag, size = 0x4, scoped, tag = 'scoped memory for tpu_custom_call.1']
    #allocation4 [shape = 's32[1]{0}', space=sflag, size = 0x4, scoped, tag = 'scoped memory for tpu_custom_call.1']
    #allocation5 [shape = 'u8[4096]{0}', space=vmem, size = 0x1000, scoped, tag = 'input window, operand 1, single buffered']
    #allocation6 [shape = 's32[1]{0}', space=sflag, size = 0x4, scoped, tag = 'scoped memory for tpu_custom_call.1']
    #allocation7 [shape = 'u8[4096]{0}', space=vmem, size = 0x1000, scoped, tag = 'output window, operand 0, single buffered']
    %7 = vsyncpa [#allocation3], 0
    %8 = vsyncpa [#allocation6], 0
    %9 = vsyncpa [#allocation4], 0
    // Predicated region
    $region2: #{tpu_custom_call.1} parent=1 // pred_check
      _
    $region3: #{tpu_custom_call.1} parent=1 // pred_check_branch
      %11 = sbr.rel (0) target = $region5
    $region4: #{tpu_custom_call.1} parent=1 // pred_region
      %13 = vsyncadd [#allocation3], 0
      %s15 = sshll.u32 %s0, 4
      %s16 = int_to_ptr.hbm [resolvable:$true] %s15
      %s17 = sshll.u32 [#allocation2], 4
      %s18 = int_to_ptr.vmem [resolvable:$true] %s17
      %20 = dma.hbm_to_vmem [thread:$0]  %s16, 128, %s18, [#allocation3]
    $region5: #{tpu_custom_call.1} parent=1 // pred_fallthru
      _
    // Predicated region
    $region6: #{tpu_custom_call.1} parent=1 // pred_check
      _
    $region7: #{tpu_custom_call.1} parent=1 // pred_check_branch
      %22 = sbr.rel (0) target = $region9
    $region8: #{tpu_custom_call.1} parent=1 // pred_region
      %24 = vsyncadd [#allocation6], 0
      %s26 = sshll.u32 %s1, 4
      %s27 = int_to_ptr.hbm [resolvable:$true] %s26
      %s28 = sshll.u32 [#allocation5], 4
      %s29 = int_to_ptr.vmem [resolvable:$true] %s28
      %31 = dma.hbm_to_vmem [thread:$0]  %s27, 128, %s29, [#allocation6]
    $region9: #{tpu_custom_call.1} parent=1 // pred_fallthru
      _
    // Predicated region
    $region10: #{tpu_custom_call.1} parent=1 // pred_check
      _
    $region11: #{tpu_custom_call.1} parent=1 // pred_check_branch
      %33 = sbr.rel (0) target = $region13
    $region12: #{tpu_custom_call.1} parent=1 // pred_region
      %35 = dma.done [#allocation3], 128
    $region13: #{tpu_custom_call.1} parent=1 // pred_fallthru
      _
    // Predicated region
    $region14: #{tpu_custom_call.1} parent=1 // pred_check
      _
    $region15: #{tpu_custom_call.1} parent=1 // pred_check_branch
      %37 = sbr.rel (0) target = $region17
    $region16: #{tpu_custom_call.1} parent=1 // pred_region
      %39 = dma.done [#allocation6], 128
    $region17: #{tpu_custom_call.1} parent=1 // pred_fallthru
      _
    %v40 = vld [vmem:[#allocation2] sm:$0xff]
    %v41 = vld [vmem:[#allocation5] sm:$0xff]
    %v42 = vsub.f32 6.0, %v41
    %v43 = vpow.pop %v42
    %v44 = vmul.f32 %v40, %v43
    %v45 = vround.ne.pseudo %v44
    %v46 = vmax.f32 %v45, -8.0
    %v47 = vmin.f32 %v46, 7.0
    %v48 = vmul.f32 %v47, 0.015625
    %49 = vst [vmem:[#allocation7] sm:$0xff] %v48
    // Predicated region
    $region18: #{tpu_custom_call.1} parent=1 // pred_check
      _
    $region19: #{tpu_custom_call.1} parent=1 // pred_check_branch
      %51 = sbr.rel (0) target = $region21
    $region20: #{tpu_custom_call.1} parent=1 // pred_region
      %53 = vsyncadd [#allocation4], 0
      %s55 = sshll.u32 [#allocation7], 4
      %s56 = int_to_ptr.vmem [resolvable:$true] %s55
      %s57 = sshll.u32 %s2, 4
      %s58 = int_to_ptr.hbm [resolvable:$true] %s57
      %60 = dma.vmem_to_hbm [thread:$0]  %s56, 128, %s58, [#allocation4]
    $region21: #{tpu_custom_call.1} parent=1 // pred_fallthru
      _
    // Predicated region
    $region22: #{tpu_custom_call.1} parent=1 // pred_check
      _
    $region23: #{tpu_custom_call.1} parent=1 // pred_check_branch
      %62 = sbr.rel (0) target = $region25
    $region24: #{tpu_custom_call.1} parent=1 // pred_region
      %64 = dma.done [#allocation4], 128
    $region25: #{tpu_custom_call.1} parent=1 // pred_fallthru
      _
    %65 = vsyncpa [#allocation3], 1
    %66 = vsyncpa [#allocation6], 1
    %67 = vsyncpa [#allocation4], 1

</llo_original>
